<compile_context>
chip_gen: v7x
topology: tpu7x:2x2x1
jax: 0.10.0
libtpu: 0.0.40
codegen_flags: <defaults>
</compile_context>

<pallas_src>
import jax
import jax.numpy as jnp
from jax.experimental import pallas as pl
from jax.experimental.pallas import tpu as pltpu


# ----------------------------- kernels --------------------------------------

def layernorm_kernel(x_ref, w_ref, b_ref, o_ref):
    # x_ref/o_ref: (1, S, D); w_ref/b_ref: (S, D). Stats over the joint (S, D) dims.
    x = x_ref[0].astype(jnp.float32)
    mean = jnp.mean(x, keepdims=True)
    var = jnp.mean(jnp.square(x - mean), keepdims=True)
    inv = jax.lax.rsqrt(var + 1e-5)
    o_ref[0] = ((x - mean) * inv * w_ref[...].astype(jnp.float32)
                + b_ref[...].astype(jnp.float32)).astype(o_ref.dtype)


def bilstm_kernel(x_ref, wihf_ref, whhf_ref, bf_ref,
                  wihb_ref, whhb_ref, bb_ref,
                  out_ref,
                  xgf_scr, xgb_scr, hf_scr, cf_scr, hb_scr, cb_scr):
    # x_ref: (B, S, D=2H); wih*: (D, 4H); whh*: (H, 4H); b*: (1, 4H)
    # out_ref: (B, S, 2H)  -- lanes [:H] forward hidden, [H:] backward hidden.
    B, S, D = x_ref.shape
    H = whhf_ref.shape[0]
    G = 4 * H

    # Input projections for all timesteps and both directions: one MXU matmul each.
    x2d = x_ref[...].reshape(B * S, D).astype(jnp.float32)
    xgf_scr[...] = (jnp.dot(x2d, wihf_ref[...], preferred_element_type=jnp.float32)
                    + bf_ref[...]).reshape(B, S, G)
    xgb_scr[...] = (jnp.dot(x2d, wihb_ref[...], preferred_element_type=jnp.float32)
                    + bb_ref[...]).reshape(B, S, G)

    hf_scr[...] = jnp.zeros_like(hf_scr)
    cf_scr[...] = jnp.zeros_like(cf_scr)
    hb_scr[...] = jnp.zeros_like(hb_scr)
    cb_scr[...] = jnp.zeros_like(cb_scr)

    def cell(gates, c_prev):
        # PyTorch LSTM gate order: i, f, g, o.
        i = jax.nn.sigmoid(gates[:, 0:H])
        f = jax.nn.sigmoid(gates[:, H:2 * H])
        g = jnp.tanh(gates[:, 2 * H:3 * H])
        o = jax.nn.sigmoid(gates[:, 3 * H:4 * H])
        c_new = f * c_prev + i * g
        h_new = o * jnp.tanh(c_new)
        return h_new, c_new

    def step(t, carry):
        # Forward direction, timestep t.
        xg_f = xgf_scr[:, pl.ds(t, 1), :].reshape(B, G)
        gates_f = xg_f + jnp.dot(hf_scr[...], whhf_ref[...],
                                 preferred_element_type=jnp.float32)
        h_f, c_f = cell(gates_f, cf_scr[...])
        hf_scr[...] = h_f
        cf_scr[...] = c_f
        out_ref[:, pl.ds(t, 1), 0:H] = h_f.reshape(B, 1, H).astype(out_ref.dtype)

        # Backward direction, timestep S - 1 - t.
        tb = S - 1 - t
        xg_b = xgb_scr[:, pl.ds(tb, 1), :].reshape(B, G)
        gates_b = xg_b + jnp.dot(hb_scr[...], whhb_ref[...],
                                 preferred_element_type=jnp.float32)
        h_b, c_b = cell(gates_b, cb_scr[...])
        hb_scr[...] = h_b
        cb_scr[...] = c_b
        out_ref[:, pl.ds(tb, 1), H:2 * H] = h_b.reshape(B, 1, H).astype(out_ref.dtype)
        return carry

    jax.lax.fori_loop(0, S, step, 0)


def concat_conv_kernel(h_ref, x_ref, w0_ref, w1_ref, bias_ref, cat_ref, y_ref):
    # h_ref, x_ref: (1, S, D=2H); w0/w1: (2D, D) (conv taps, transposed); bias: (1, D)
    # cat_ref: (1, S, 2D)   -- torch.cat((input_h, lstm_out), dim=2)
    # y_ref:   (1, S+1, D)  -- Conv1d(k=2, pad=1) along the sequence axis
    S = h_ref.shape[1]
    D = h_ref.shape[2]

    # Feature concat = write the two lane halves of the (lane-dense, 4H-wide) output tile.
    cat_ref[0, :, 0:D] = h_ref[0]
    cat_ref[0, :, D:2 * D] = x_ref[0]
    cat = cat_ref[0].astype(jnp.float32)                                   # (S, 2D)

    tap0 = jnp.dot(cat, w0_ref[...], preferred_element_type=jnp.float32)   # (S, D)
    tap1 = jnp.dot(cat, w1_ref[...], preferred_element_type=jnp.float32)   # (S, D)
    bias = bias_ref[...].astype(jnp.float32)                               # (1, D)

    # y[p] = bias + tap0[p - 1] + tap1[p]   (terms outside [0, S) are the zero padding)
    y_ref[0, 0:1, :] = (tap1[0:1, :] + bias).astype(y_ref.dtype)
    y_ref[0, 1:S, :] = (tap0[0:S - 1, :] + tap1[1:S, :] + bias).astype(y_ref.dtype)
    y_ref[0, S:S + 1, :] = (tap0[S - 1:S, :] + bias).astype(y_ref.dtype)


# ----------------------------- wrapper ---------------------------------------

def inverse_decoding_forward(input_h, input_x, params):
    B, S, D = input_x.shape            # D = 2 * hidden_size
    H = D // 2
    G = 4 * H                          # LSTM gate width
    C_in = 2 * D                       # conv in_channels  = 4 * hidden_size
    C_out = D                          # conv out_channels = 2 * hidden_size
    dtype = input_x.dtype

    # ---- 1. LayerNorm over the joint (S, D) dims; grid over batch (parallel / megacore).
    xn = pl.pallas_call(
        layernorm_kernel,
        out_shape=jax.ShapeDtypeStruct((B, S, D), dtype),
        grid=(B,),
        in_specs=[
            pl.BlockSpec((1, S, D), lambda b: (b, 0, 0)),
            pl.BlockSpec((S, D), lambda b: (0, 0)),      # resident affine weight
            pl.BlockSpec((S, D), lambda b: (0, 0)),      # resident affine bias
        ],
        out_specs=pl.BlockSpec((1, S, D), lambda b: (b, 0, 0)),
        compiler_params=pltpu.CompilerParams(dimension_semantics=("parallel",)),
    )(input_x, params["ln_w"], params["ln_b"])

    # dropout_1 / dropout_2: identity at inference.
    # TODO(synk): training-mode dropout (rate 0.45) would use pltpu.prng_seed /
    # pltpu.prng_random_bits; this forward implements eval-mode semantics.

    # ---- 2. Bidirectional LSTM, single kernel (recurrence is sequential over S).
    wihf_t = params["wih_f"].T                              # (D, G)
    whhf_t = params["whh_f"].T                              # (H, G)
    bf = (params["bih_f"] + params["bhh_f"]).reshape(1, G)
    wihb_t = params["wih_b"].T
    whhb_t = params["whh_b"].T
    bb = (params["bih_b"] + params["bhh_b"]).reshape(1, G)

    lstm_out = pl.pallas_call(
        bilstm_kernel,
        out_shape=jax.ShapeDtypeStruct((B, S, D), dtype),
        grid=(1,),
        in_specs=[
            pl.BlockSpec((B, S, D), lambda i: (0, 0, 0)),
            pl.BlockSpec((D, G), lambda i: (0, 0)),
            pl.BlockSpec((H, G), lambda i: (0, 0)),
            pl.BlockSpec((1, G), lambda i: (0, 0)),
            pl.BlockSpec((D, G), lambda i: (0, 0)),
            pl.BlockSpec((H, G), lambda i: (0, 0)),
            pl.BlockSpec((1, G), lambda i: (0, 0)),
        ],
        out_specs=pl.BlockSpec((B, S, D), lambda i: (0, 0, 0)),
        scratch_shapes=[
            pltpu.VMEM((B, S, G), jnp.float32),   # forward x-projected gates
            pltpu.VMEM((B, S, G), jnp.float32),   # backward x-projected gates
            pltpu.VMEM((B, H), jnp.float32),      # h_fwd state
            pltpu.VMEM((B, H), jnp.float32),      # c_fwd state
            pltpu.VMEM((B, H), jnp.float32),      # h_bwd state
            pltpu.VMEM((B, H), jnp.float32),      # c_bwd state
        ],
        compiler_params=pltpu.CompilerParams(dimension_semantics=("arbitrary",)),
    )(xn, wihf_t, whhf_t, bf, wihb_t, whhb_t, bb)

    # ---- 3. concat(input_h, lstm_out) fused with Conv1d(k=2, pad=1); grid over batch.
    w0t = params["conv_w"][:, :, 0].T                       # (C_in, C_out)
    w1t = params["conv_w"][:, :, 1].T                       # (C_in, C_out)
    cbias = params["conv_b"].reshape(1, C_out)

    h_cat, y = pl.pallas_call(
        concat_conv_kernel,
        out_shape=(
            jax.ShapeDtypeStruct((B, S, C_in), dtype),
            jax.ShapeDtypeStruct((B, S + 1, C_out), dtype),
        ),
        grid=(B,),
        in_specs=[
            pl.BlockSpec((1, S, D), lambda b: (b, 0, 0)),
            pl.BlockSpec((1, S, D), lambda b: (b, 0, 0)),
            pl.BlockSpec((C_in, C_out), lambda b: (0, 0)),   # resident conv tap 0
            pl.BlockSpec((C_in, C_out), lambda b: (0, 0)),   # resident conv tap 1
            pl.BlockSpec((1, C_out), lambda b: (0, 0)),      # resident conv bias
        ],
        out_specs=(
            pl.BlockSpec((1, S, C_in), lambda b: (b, 0, 0)),
            pl.BlockSpec((1, S + 1, C_out), lambda b: (b, 0, 0)),
        ),
        compiler_params=pltpu.CompilerParams(dimension_semantics=("parallel",)),
    )(input_h, lstm_out, w0t, w1t, cbias)

    return h_cat, y


# ----------------------------- pure-JAX reference -----------------------------

def ref_forward(input_h, input_x, p):
    H = p["whh_f"].shape[1]
    hp = jax.lax.Precision.HIGHEST

    mean = jnp.mean(input_x, axis=(1, 2), keepdims=True)
    var = jnp.mean(jnp.square(input_x - mean), axis=(1, 2), keepdims=True)
    xn = (input_x - mean) / jnp.sqrt(var + 1e-5) * p["ln_w"] + p["ln_b"]

    def run_dir(x, wih, whh, bih, bhh, reverse):
        B, S, _ = x.shape
        xs = jnp.flip(x, axis=1) if reverse else x

        def step(carry, xt):
            h, c = carry
            gates = (jnp.dot(xt, wih.T, precision=hp) + bih
                     + jnp.dot(h, whh.T, precision=hp) + bhh)
            i = jax.nn.sigmoid(gates[:, 0:H])
            f = jax.nn.sigmoid(gates[:, H:2 * H])
            g = jnp.tanh(gates[:, 2 * H:3 * H])
            o = jax.nn.sigmoid(gates[:, 3 * H:4 * H])
            c = f * c + i * g
            h = o * jnp.tanh(c)
            return (h, c), h

        init = (jnp.zeros((B, H), x.dtype), jnp.zeros((B, H), x.dtype))
        _, hs = jax.lax.scan(step, init, jnp.swapaxes(xs, 0, 1))
        hs = jnp.swapaxes(hs, 0, 1)
        return jnp.flip(hs, axis=1) if reverse else hs

    out_f = run_dir(xn, p["wih_f"], p["whh_f"], p["bih_f"], p["bhh_f"], False)
    out_b = run_dir(xn, p["wih_b"], p["whh_b"], p["bih_b"], p["bhh_b"], True)
    lstm_out = jnp.concatenate([out_f, out_b], axis=-1)

    h_cat = jnp.concatenate([input_h, lstm_out], axis=-1)    # (B, S, 4H)

    xc = jnp.swapaxes(h_cat, 1, 2)                           # (B, 4H, S)
    y = jax.lax.conv_general_dilated(
        xc, p["conv_w"], window_strides=(1,), padding=[(1, 1)],
        dimension_numbers=("NCH", "OIH", "NCH"), precision=hp)
    y = y + p["conv_b"][None, :, None]
    y = jnp.swapaxes(y, 1, 2)                                # (B, S+1, 2H)
    return h_cat, y


# ----------------------------- demo / check -----------------------------------

if __name__ == "__main__":
    # Small shapes consistent with the module: batch=2, seq=8, hidden_size=32.
    B, S, Hsz = 2, 8, 32
    D = 2 * Hsz                        # LayerNorm / LSTM-input feature dim = 64
    G = 4 * Hsz                        # LSTM gate width = 128
    C_in, C_out = 4 * Hsz, 2 * Hsz     # conv channels: 128 -> 64

    key = jax.random.PRNGKey(0)
    ks = jax.random.split(key, 16)
    sc = 0.1
    params = {
        "ln_w": 1.0 + sc * jax.random.normal(ks[0], (S, D), jnp.float32),
        "ln_b": sc * jax.random.normal(ks[1], (S, D), jnp.float32),
        "wih_f": sc * jax.random.normal(ks[2], (G, D), jnp.float32),
        "whh_f": sc * jax.random.normal(ks[3], (G, Hsz), jnp.float32),
        "bih_f": sc * jax.random.normal(ks[4], (G,), jnp.float32),
        "bhh_f": sc * jax.random.normal(ks[5], (G,), jnp.float32),
        "wih_b": sc * jax.random.normal(ks[6], (G, D), jnp.float32),
        "whh_b": sc * jax.random.normal(ks[7], (G, Hsz), jnp.float32),
        "bih_b": sc * jax.random.normal(ks[8], (G,), jnp.float32),
        "bhh_b": sc * jax.random.normal(ks[9], (G,), jnp.float32),
        "conv_w": sc * jax.random.normal(ks[10], (C_out, C_in, 2), jnp.float32),
        "conv_b": sc * jax.random.normal(ks[11], (C_out,), jnp.float32),
    }
    input_x = jax.random.normal(ks[12], (B, S, D), jnp.float32)
    input_h = jax.random.normal(ks[13], (B, S, D), jnp.float32)

    h_out, y_out = inverse_decoding_forward(input_h, input_x, params)
    h_out = jax.block_until_ready(h_out)
    y_out = jax.block_until_ready(y_out)

    h_exp, y_exp = ref_forward(input_h, input_x, params)

    assert h_out.shape == (B, S, C_in), h_out.shape
    assert y_out.shape == (B, S + 1, C_out), y_out.shape
    assert jnp.allclose(h_out, h_exp, atol=2e-3, rtol=2e-3), \
        float(jnp.max(jnp.abs(h_out - h_exp)))
    assert jnp.allclose(y_out, y_exp, atol=2e-3, rtol=2e-3), \
        float(jnp.max(jnp.abs(y_out - y_exp)))

    print("KERNEL_OK")
</pallas_src>

<mosaic_0001>
module attributes {stable_mosaic.version = 11 : i64} {
  func.func @layernorm_kernel(%arg0: i32, %arg1: memref<1x8x64xf32, #tpu.memory_space<vmem>>, %arg2: memref<8x64xf32, #tpu.memory_space<vmem>>, %arg3: memref<8x64xf32, #tpu.memory_space<vmem>>, %arg4: memref<1x8x64xf32, #tpu.memory_space<vmem>>) attributes {dimension_semantics = [#tpu.dimension_semantics<parallel>], iteration_bounds = array<i64: 2>, scalar_prefetch = 0 : i64, scratch_operands = 0 : i64, tpu.core_type = #tpu.core_type<tc>, window_params = [{transform_indices = @transform_0, window_bounds = array<i64: 1, 8, 64>}, {pipeline_mode = #tpu.pipeline_mode<synchronous>, transform_indices = @transform_1, window_bounds = array<i64: 8, 64>}, {pipeline_mode = #tpu.pipeline_mode<synchronous>, transform_indices = @transform_2, window_bounds = array<i64: 8, 64>}, {transform_indices = @transform_3, window_bounds = array<i64: 1, 8, 64>}]} {
    %c0 = arith.constant 0 : index
    %c0_0 = arith.constant 0 : index
    %c0_1 = arith.constant 0 : index
    %0 = vector.load %arg1[%c0, %c0_0, %c0_1] : memref<1x8x64xf32, #tpu.memory_space<vmem>>, vector<1x8x64xf32>
    %1 = vector.shape_cast %0 : vector<1x8x64xf32> to vector<8x64xf32>
    %2 = vector.shape_cast %1 : vector<8x64xf32> to vector<1x8x64xf32>
    %cst = arith.constant dense<0.000000e+00> : vector<1xf32>
    %3 = vector.multi_reduction <add>, %2, %cst [1, 2] : vector<1x8x64xf32> to vector<1xf32>
    %4 = vector.shape_cast %3 : vector<1xf32> to vector<1x1x1xf32>
    %5 = vector.extract %4[0, 0, 0] : f32 from vector<1x1x1xf32>
    %6 = vector.broadcast %5 : f32 to vector<1x1xf32>
    %cst_2 = arith.constant 5.120000e+02 : f32
    %7 = vector.broadcast %cst_2 : f32 to vector<1x1xf32>
    %8 = arith.divf %6, %7 : vector<1x1xf32>
    %9 = vector.broadcast %8 : vector<1x1xf32> to vector<8x64xf32>
    %10 = arith.subf %1, %9 : vector<8x64xf32>
    %11 = arith.mulf %10, %10 : vector<8x64xf32>
    %12 = vector.shape_cast %11 : vector<8x64xf32> to vector<1x8x64xf32>
    %cst_3 = arith.constant dense<0.000000e+00> : vector<1xf32>
    %13 = vector.multi_reduction <add>, %12, %cst_3 [1, 2] : vector<1x8x64xf32> to vector<1xf32>
    %14 = vector.shape_cast %13 : vector<1xf32> to vector<1x1x1xf32>
    %15 = vector.extract %14[0, 0, 0] : f32 from vector<1x1x1xf32>
    %16 = vector.broadcast %15 : f32 to vector<1x1xf32>
    %cst_4 = arith.constant 5.120000e+02 : f32
    %17 = vector.broadcast %cst_4 : f32 to vector<1x1xf32>
    %18 = arith.divf %16, %17 : vector<1x1xf32>
    %cst_5 = arith.constant 9.99999974E-6 : f32
    %19 = vector.broadcast %cst_5 : f32 to vector<1x1xf32>
    %20 = arith.addf %18, %19 : vector<1x1xf32>
    %21 = math.rsqrt %20 : vector<1x1xf32>
    %22 = vector.broadcast %8 : vector<1x1xf32> to vector<8x64xf32>
    %23 = arith.subf %1, %22 : vector<8x64xf32>
    %24 = vector.broadcast %21 : vector<1x1xf32> to vector<8x64xf32>
    %25 = arith.mulf %23, %24 : vector<8x64xf32>
    %c0_6 = arith.constant 0 : index
    %c0_7 = arith.constant 0 : index
    %26 = vector.load %arg2[%c0_6, %c0_7] : memref<8x64xf32, #tpu.memory_space<vmem>>, vector<8x64xf32>
    %27 = arith.mulf %25, %26 : vector<8x64xf32>
    %c0_8 = arith.constant 0 : index
    %c0_9 = arith.constant 0 : index
    %28 = vector.load %arg3[%c0_8, %c0_9] : memref<8x64xf32, #tpu.memory_space<vmem>>, vector<8x64xf32>
    %29 = arith.addf %27, %28 : vector<8x64xf32>
    %c0_10 = arith.constant 0 : index
    %c0_11 = arith.constant 0 : index
    %c0_12 = arith.constant 0 : index
    %30 = vector.load %arg4[%c0_10, %c0_11, %c0_12] : memref<1x8x64xf32, #tpu.memory_space<vmem>>, vector<1x8x64xf32>
    %31 = vector.shape_cast %30 : vector<1x8x64xf32> to vector<8x64xf32>
    %32 = vector.shape_cast %29 : vector<8x64xf32> to vector<1x8x64xf32>
    tpu.vector_store %arg4[%c0_10, %c0_11, %c0_12], %32 {strides = array<i32>} : memref<1x8x64xf32, #tpu.memory_space<vmem>>, vector<1x8x64xf32>,
    return
  }
  func.func @transform_0(%arg0: i32) -> (i32, i32, i32) {
    %c0_i32 = arith.constant 0 : i32
    %c0_i32_0 = arith.constant 0 : i32
    %c0_i32_1 = arith.constant 0 : i32
    return %arg0, %c0_i32, %c0_i32_0 : i32, i32, i32
  }
  func.func @transform_1(%arg0: i32) -> (i32, i32) {
    %c0_i32 = arith.constant 0 : i32
    %c0_i32_0 = arith.constant 0 : i32
    %c0_i32_1 = arith.constant 0 : i32
    return %c0_i32, %c0_i32_0 : i32, i32
  }
  func.func @transform_2(%arg0: i32) -> (i32, i32) {
    %c0_i32 = arith.constant 0 : i32
    %c0_i32_0 = arith.constant 0 : i32
    %c0_i32_1 = arith.constant 0 : i32
    return %c0_i32, %c0_i32_0 : i32, i32
  }
  func.func @transform_3(%arg0: i32) -> (i32, i32, i32) {
    %c0_i32 = arith.constant 0 : i32
    %c0_i32_0 = arith.constant 0 : i32
    %c0_i32_1 = arith.constant 0 : i32
    return %arg0, %c0_i32, %c0_i32_0 : i32, i32, i32
  }
}

</mosaic_0001>

<llo_original>
// kernel: tpu_custom_call.1
$region0: #{tpu_custom_call.1}
  #allocation0 [shape = 'u32[]', space=smem, size = 0x4, offset = 0x4, fixed_abs, tag = 'smem constant byte address 0x4 - core index']
  #allocation1 [shape = 'u32[144,128]{1,0:T(1,128)}', space=vmem, size = 0x12000, scoped, tag = 'internal scratch']
  %s0 = inlined_call_operand.hbm [shape: f32[2,8,64], index: 0, kind: input, shape index: {}]
  %s1 = inlined_call_operand.hbm [shape: f32[8,64], index: 1, kind: input, shape index: {}]
  %s2 = inlined_call_operand.hbm [shape: f32[8,64], index: 2, kind: input, shape index: {}]
  %s3 = inlined_call_operand.hbm [shape: f32[2,8,64], index: 3, kind: output, shape index: {}]
  %s4 = sld [smem:[#allocation0]]
  $region57: #{tpu_custom_call.1} parent=0
    _
  %s6 = ssub.s32 1, %s4
  %s7 = scalar_select 0, %s6, %s4
  $region1: #{tpu_custom_call.1} parent=0
    #allocation2 [shape = 'u8[8192]{0}', space=vmem, size = 0x2000, scoped, tag = 'input window, operand 0']
    #allocation3 [shape = 's32[2]{0}', space=sflag, size = 0x8, scoped, tag = 'scoped memory for tpu_custom_call.1']
    #allocation4 [shape = 's32[2]{0}', space=sflag, size = 0x8, scoped, tag = 'scoped memory for tpu_custom_call.1']
    #allocation5 [shape = 'u8[4096]{0}', space=vmem, size = 0x1000, scoped, tag = 'input window, operand 1, single buffered']
    #allocation6 [shape = 's32[1]{0}', space=sflag, size = 0x4, scoped, tag = 'scoped memory for tpu_custom_call.1']
    #allocation7 [shape = 'u8[4096]{0}', space=vmem, size = 0x1000, scoped, tag = 'input window, operand 2, single buffered']
    #allocation8 [shape = 'u8[8192]{0}', space=vmem, size = 0x2000, scoped, tag = 'output window, operand 0']
    %8 = vsyncpa [#allocation3], 0
    %s9 = scalar_lea.sflag [#allocation3], 1
    %10 = vsyncpa %s9, 0
    %11 = vsyncpa [#allocation6], 0
    %12 = vsyncpa [#allocation4], 0
    %s13 = scalar_lea.sflag [#allocation4], 1
    %14 = vsyncpa %s13, 0
    loop: start=0, step=1, limit=4
    $region2: #{tpu_custom_call.1} parent=1 // loop_pre_header
      _
    $region3: #{tpu_custom_call.1} parent=1 // loop_header
      %s16 = sphi 0, %s20
      %p17 = scmp.ge.s32.totalorder %s16, 4
      %s26 = sphi 0, %s28
      %s29 = sphi 0, %s26
      %s30 = sphi 0, %s29
      %s46 = sphi 0, %s30
      %s50 = sphi 0, %s50
      %s52 = sphi 0, %s50
      %s53 = sphi 0, %s52
      %s67 = sphi 0, %s53
      %s71 = sphi 0, %s71
      %s73 = sphi 0, %s71
      %s74 = sphi 0, %s73
      %s88 = sphi 0, %s74
      %s94 = sphi 0, %s96
      %s97 = sphi 0, %s94
      %s98 = sphi 0, %s97
      %s114 = sphi 0, %s98
    $region4: #{tpu_custom_call.1} parent=1 // loop_header_branch
      %19 = sbr.rel (%p17) target = $region8
    $region5: #{tpu_custom_call.1} parent=1 // loop_body
      %s21 = ssub.s32 %s16, 1
      %s22 = ssub.s32 %s16, 2
      %s23 = sadd.s32 %s16, 1
      %s24 = ssub.s32 %s16, %s23
      %p25 = scmp.eq.s32.totalorder %s24, 0
      %s27 = sadd.s32 %s26, 1
      %s28 = scalar_select %p25, %s26, %s27
      %p31 = pneg %p25
      %p32 = scmp.eq.s32.totalorder %s16, 1
      %p33 = por %p31, %p32
      %p34 = scmp.ne.s32.totalorder %s26, %s29
      %p35 = scmp.eq.s32.totalorder %s16, 0
      %p36 = por %p34, %p35
      %p37 = scmp.ne.s32.totalorder %s26, %s29
      %p38 = scmp.eq.s32.totalorder %s21, 1
      %p39 = por %p37, %p38
      %p40 = scmp.ne.s32.totalorder %s29, %s30
      %p41 = scmp.eq.s32.totalorder %s21, 0
      %p42 = por %p40, %p41
      %p43 = scmp.ne.s32.totalorder %s29, %s30
      %p44 = scmp.eq.s32.totalorder %s22, 1
      %p45 = por %p43, %p44
      %p47 = scmp.ne.s32.totalorder %s30, %s46
      %p48 = scmp.eq.s32.totalorder %s22, 0
      %p49 = por %p47, %p48
      %s51 = sadd.s32 %s50, 1
      %p54 = scmp.eq.s32.totalorder %s16, 1
      %p55 = scmp.ne.s32.totalorder %s50, %s52
      %p56 = scmp.eq.s32.totalorder %s16, 0
      %p57 = por %p55, %p56
      %p58 = scmp.ne.s32.totalorder %s50, %s52
      %p59 = scmp.eq.s32.totalorder %s21, 1
      %p60 = por %p58, %p59
      %p61 = scmp.ne.s32.totalorder %s52, %s53
      %p62 = scmp.eq.s32.totalorder %s21, 0
      %p63 = por %p61, %p62
      %p64 = scmp.ne.s32.totalorder %s52, %s53
      %p65 = scmp.eq.s32.totalorder %s22, 1
      %p66 = por %p64, %p65
      %p68 = scmp.ne.s32.totalorder %s53, %s67
      %p69 = scmp.eq.s32.totalorder %s22, 0
      %p70 = por %p68, %p69
      %s72 = sadd.s32 %s71, 1
      %p75 = scmp.eq.s32.totalorder %s16, 1
      %p76 = scmp.ne.s32.totalorder %s71, %s73
      %p77 = scmp.eq.s32.totalorder %s16, 0
      %p78 = por %p76, %p77
      %p79 = scmp.ne.s32.totalorder %s71, %s73
      %p80 = scmp.eq.s32.totalorder %s21, 1
      %p81 = por %p79, %p80
      %p82 = scmp.ne.s32.totalorder %s73, %s74
      %p83 = scmp.eq.s32.totalorder %s21, 0
      %p84 = por %p82, %p83
      %p85 = scmp.ne.s32.totalorder %s73, %s74
      %p86 = scmp.eq.s32.totalorder %s22, 1
      %p87 = por %p85, %p86
      %p89 = scmp.ne.s32.totalorder %s74, %s88
      %p90 = scmp.eq.s32.totalorder %s22, 0
      %p91 = por %p89, %p90
      %s92 = ssub.s32 %s16, %s23
      %p93 = scmp.eq.s32.totalorder %s92, 0
      %s95 = sadd.s32 %s94, 1
      %s96 = scalar_select %p93, %s94, %s95
      %p99 = pneg %p93
      %p100 = scmp.eq.s32.totalorder %s16, 1
      %p101 = por %p99, %p100
      %p102 = scmp.ne.s32.totalorder %s94, %s97
      %p103 = scmp.eq.s32.totalorder %s16, 0
      %p104 = por %p102, %p103
      %p105 = scmp.ne.s32.totalorder %s94, %s97
      %p106 = scmp.eq.s32.totalorder %s21, 1
      %p107 = por %p105, %p106
      %p108 = scmp.ne.s32.totalorder %s97, %s98
      %p109 = scmp.eq.s32.totalorder %s21, 0
      %p110 = por %p108, %p109
      %p111 = scmp.ne.s32.totalorder %s97, %s98
      %p112 = scmp.eq.s32.totalorder %s22, 1
      %p113 = por %p111, %p112
      %p115 = scmp.ne.s32.totalorder %s98, %s114
      %p116 = scmp.eq.s32.totalorder %s22, 0
      %p117 = por %p115, %p116
      %p118 = scmp.le.s32.totalorder 1, %s16
      %p119 = scmp.lt.s32.totalorder %s16, 3
      %p120 = pnand %p118, %p119
      %p121 = pneg %p120
      // Predicated region
      $region9: #{tpu_custom_call.1} parent=5 // pred_check
        _
      $region10: #{tpu_custom_call.1} parent=5 // pred_check_branch
        %123 = sbr.rel (%p120) target = $region12
      $region11: #{tpu_custom_call.1} parent=5 // pred_region
        %s124 = ssub.s32 %s16, 1
        // Predicated region
        $region13: #{tpu_custom_call.1} parent=11 // pred_check
          %p125 = pneg %p63
        $region14: #{tpu_custom_call.1} parent=11 // pred_check_branch
          %127 = sbr.rel (%p125) target = $region16
        $region15: #{tpu_custom_call.1} parent=11 // pred_region
          %s129 = ssub.s32 128, 128
          %130 = vsyncadd [#allocation6], %s129
          %s132 = sshll.u32 [#allocation5], 4
          %s133 = int_to_ptr.vmem [resolvable:$true] %s132
          %135 = dma.hbm_to_vmem [thread:$0]  %s1, 128, %s133, [#allocation6]
        $region16: #{tpu_custom_call.1} parent=11 // pred_fallthru
          _
        // Predicated region
        $region17: #{tpu_custom_call.1} parent=11 // pred_check
          %p136 = pneg %p84
        $region18: #{tpu_custom_call.1} parent=11 // pred_check_branch
          %138 = sbr.rel (%p136) target = $region20
        $region19: #{tpu_custom_call.1} parent=11 // pred_region
          %s140 = ssub.s32 128, 128
          %141 = vsyncadd [#allocation6], %s140
          %s143 = sshll.u32 [#allocation7], 4
          %s144 = int_to_ptr.vmem [resolvable:$true] %s143
          %146 = dma.hbm_to_vmem [thread:$0]  %s2, 128, %s144, [#allocation6]
        $region20: #{tpu_custom_call.1} parent=11 // pred_fallthru
          _
      $region12: #{tpu_custom_call.1} parent=5 // pred_fallthru
        _
      %p147 = scmp.lt.s32.totalorder %s16, 2
      // Predicated region
      $region21: #{tpu_custom_call.1} parent=5 // pred_check
        %p148 = pneg %p147
      $region22: #{tpu_custom_call.1} parent=5 // pred_check_branch
        %150 = sbr.rel (%p148) target = $region24
      $region23: #{tpu_custom_call.1} parent=5 // pred_region
        // Predicated region
        $region25: #{tpu_custom_call.1} parent=23 // pred_check
          %p151 = pneg %p36
        $region26: #{tpu_custom_call.1} parent=23 // pred_check_branch
          %153 = sbr.rel (%p151) target = $region28
        $region27: #{tpu_custom_call.1} parent=23 // pred_region
          %s154 = sand.u32 %s26, 1
          %s155 = scalar_lea.sflag [#allocation3], %s154
          %s156 = sand.u32 %s26, 1
          %s157 = smul.addr %s156, 8
          %s158 = scalar_lea.vmem [#allocation2], %s157
          %s160 = ssub.s32 128, 128
          %161 = vsyncadd %s155, %s160
          %s162 = smul.addr %s16, 128
          %s163 = scalar_lea.hbm %s0, %s162
          %s165 = sshll.u32 %s158, 4
          %s166 = int_to_ptr.vmem [resolvable:$true] %s165
          %168 = dma.hbm_to_vmem [thread:$0]  %s163, 128, %s166, %s155
        $region28: #{tpu_custom_call.1} parent=23 // pred_fallthru
          _
      $region24: #{tpu_custom_call.1} parent=5 // pred_fallthru
        _
      %p169 = scmp.le.s32.totalorder 1, %s16
      %p170 = scmp.lt.s32.totalorder %s16, 3
      %p171 = pnand %p169, %p170
      %p172 = pneg %p171
      // Predicated region
      $region29: #{tpu_custom_call.1} parent=5 // pred_check
        _
      $region30: #{tpu_custom_call.1} parent=5 // pred_check_branch
        %174 = sbr.rel (%p171) target = $region32
      $region31: #{tpu_custom_call.1} parent=5 // pred_region
        %s175 = ssub.s32 %s16, 1
        %s176 = sand.u32 %s29, 1
        %s177 = scalar_lea.sflag [#allocation3], %s176
        %s178 = sand.u32 %s29, 1
        %s179 = smul.addr %s178, 8
        %s180 = scalar_lea.vmem [#allocation2], %s179
        // Predicated region
        $region33: #{tpu_custom_call.1} parent=31 // pred_check
          %p181 = pneg %p42
        $region34: #{tpu_custom_call.1} parent=31 // pred_check_branch
          %183 = sbr.rel (%p181) target = $region36
        $region35: #{tpu_custom_call.1} parent=31 // pred_region
          %184 = dma.done %s177, 128
        $region36: #{tpu_custom_call.1} parent=31 // pred_fallthru
          _
        // Predicated region
        $region37: #{tpu_custom_call.1} parent=31 // pred_check
          %p185 = pneg %p63
        $region38: #{tpu_custom_call.1} parent=31 // pred_check_branch
          %187 = sbr.rel (%p185) target = $region40
        $region39: #{tpu_custom_call.1} parent=31 // pred_region
          %188 = dma.done [#allocation6], 128
        $region40: #{tpu_custom_call.1} parent=31 // pred_fallthru
          _
        // Predicated region
        $region41: #{tpu_custom_call.1} parent=31 // pred_check
          %p189 = pneg %p84
        $region42: #{tpu_custom_call.1} parent=31 // pred_check_branch
          %191 = sbr.rel (%p189) target = $region44
        $region43: #{tpu_custom_call.1} parent=31 // pred_region
          %192 = dma.done [#allocation6], 128
        $region44: #{tpu_custom_call.1} parent=31 // pred_fallthru
          _
        %s193 = sand.u32 %s29, 1
        %s194 = scalar_lea.sflag [#allocation3], %s193
        %s195 = sand.u32 %s29, 1
        %s196 = smul.addr %s195, 8
        %s197 = scalar_lea.vmem [#allocation2], %s196
        %p198 = pneg %p42
        %p199 = pneg %p39
        %p200 = pneg %p63
        %p201 = pneg %p60
        %p202 = pneg %p84
        %p203 = pneg %p81
        %p204 = pneg %p110
        %p205 = pneg %p107
        %s206 = sand.u32 %s97, 1
        %s207 = scalar_lea.sflag [#allocation4], %s206
        %s208 = sand.u32 %s97, 1
        %s209 = smul.addr %s208, 8
        %s210 = scalar_lea.vmem [#allocation8], %s209
        %v211 = vld [vmem:[%s180] sm:$0xff]
        %vm212 = vcmask 523264
        %v213 = vsel %vm212, %v211, 0.0
        %214 = vadd.xlane.f32.xlu0 %v213
        %v215 = vpop.xlane.xlu0 %214
        %v216 = vrot.slane %v215, 4
        %v217 = vadd.f32 %v215, %v216
        %v218 = vrot.slane %v217, 2
        %v219 = vadd.f32 %v217, %v218
        %v220 = vrot.slane %v219, 1
        %v221 = vadd.f32 %v219, %v220
        %s222 = vtos %v221
        %v223 = vstv %s222
        %v224 = vrcp.pop 512.0
        %v225 = vmul.f32 %v223, %v224
        %v226 = vsub.f32 %v211, %v225
        %v227 = vmul.f32 %v226, %v226
        %v228 = vsel %vm212, %v227, 0.0
        %229 = vadd.xlane.f32.xlu0 %v228
        %v230 = vpop.xlane.xlu0 %229
        %v231 = vrot.slane %v230, 4
        %v232 = vadd.f32 %v230, %v231
        %v233 = vrot.slane %v232, 2
        %v234 = vadd.f32 %v232, %v233
        %v235 = vrot.slane %v234, 1
        %v236 = vadd.f32 %v234, %v235
        %s237 = vtos %v236
        %v238 = vstv %s237
        %v239 = vmul.f32 %v238, %v224
        %v240 = vadd.f32 %v239, 1e-05
        %v241 = vrsqrt.pop %v240
        %v242 = vmul.f32 %v226, %v241
        %v243 = vld [vmem:[#allocation5] sm:$0xff]
        %v244 = vmul.f32 %v242, %v243
        %v245 = vld [vmem:[#allocation7] sm:$0xff]
        %v246 = vadd.f32 %v244, %v245
        %247 = vst.msk [vmem:[%s210] sm:$0xff] %vm212, %v246
        %s248 = sand.u32 %s97, 1
        %s249 = scalar_lea.sflag [#allocation4], %s248
        %s250 = sand.u32 %s97, 1
        %s251 = smul.addr %s250, 8
        %s252 = scalar_lea.vmem [#allocation8], %s251
        // Predicated region
        $region45: #{tpu_custom_call.1} parent=31 // pred_check
          %p253 = pneg %p107
        $region46: #{tpu_custom_call.1} parent=31 // pred_check_branch
          %255 = sbr.rel (%p253) target = $region48
        $region47: #{tpu_custom_call.1} parent=31 // pred_region
          %s257 = ssub.s32 128, 128
          %258 = vsyncadd %s249, %s257
          %s259 = smul.addr %s21, 128
          %s260 = scalar_lea.hbm %s3, %s259
          %s262 = sshll.u32 %s252, 4
          %s263 = int_to_ptr.vmem [resolvable:$true] %s262
          %265 = dma.vmem_to_hbm [thread:$0]  %s263, 128, %s260, %s249
        $region48: #{tpu_custom_call.1} parent=31 // pred_fallthru
          _
      $region32: #{tpu_custom_call.1} parent=5 // pred_fallthru
        _
      %p266 = scmp.le.s32.totalorder 2, %s16
      // Predicated region
      $region49: #{tpu_custom_call.1} parent=5 // pred_check
        %p267 = pneg %p266
      $region50: #{tpu_custom_call.1} parent=5 // pred_check_branch
        %269 = sbr.rel (%p267) target = $region52
      $region51: #{tpu_custom_call.1} parent=5 // pred_region
        %s270 = ssub.s32 %s16, 2
        // Predicated region
        $region53: #{tpu_custom_call.1} parent=51 // pred_check
          %p271 = pneg %p113
        $region54: #{tpu_custom_call.1} parent=51 // pred_check_branch
          %273 = sbr.rel (%p271) target = $region56
        $region55: #{tpu_custom_call.1} parent=51 // pred_region
          %s274 = sand.u32 %s98, 1
          %s275 = scalar_lea.sflag [#allocation4], %s274
          %s276 = sand.u32 %s98, 1
          %s277 = smul.addr %s276, 8
          %s278 = scalar_lea.vmem [#allocation8], %s277
          %279 = dma.done %s275, 128
        $region56: #{tpu_custom_call.1} parent=51 // pred_fallthru
          _
      $region52: #{tpu_custom_call.1} parent=5 // pred_fallthru
        _
    $region6: #{tpu_custom_call.1} parent=1 // loop_footer
      %s20 = sadd.s32 1, %s16
    $region7: #{tpu_custom_call.1} parent=1 // loop_footer_branch
      %15 = sbr.rel target = $region3
    $region8: #{tpu_custom_call.1} parent=1 // loop_exit
      _
    %280 = vsyncpa [#allocation3], 1
    %s281 = scalar_lea.sflag [#allocation3], 1
    %282 = vsyncpa %s281, 1
    %283 = vsyncpa [#allocation6], 1
    %284 = vsyncpa [#allocation4], 1
    %s285 = scalar_lea.sflag [#allocation4], 1
    %286 = vsyncpa %s285, 1

</llo_original>
